<compile_context>
chip_gen: v7x
topology: tpu7x:2x2x1
jax: 0.10.0
libtpu: 0.0.40
codegen_flags: <defaults>
</compile_context>

<pallas_src>
import functools

import jax
import jax.numpy as jnp
from jax import lax
from jax.experimental import pallas as pl
from jax.experimental.pallas import tpu as pltpu

_I32_MIN = -(2 ** 31)


def _pedal_kernel(feat_ref, cent_t_ref, cn_ref, fn_ref, pos_ref,
                  rowloss_ref, idx_ref, cand_ref,
                  *, scale, k, tile_n, col_bits):
    j = pl.program_id(1)
    n_tiles = pl.num_programs(1)

    lo_mask = (1 << col_bits) - 1          # static python ints -> folded constants
    hi_mask = -(1 << col_bits)             # int32 pattern with low col_bits cleared
    neg = jnp.int32(_I32_MIN)

    # --- init resident accumulators: running y-sum lives in the rowloss output
    #     block (same block index for all j); running top-k keys live in the
    #     lane-dense (tile_m, 128) VMEM scratch ------------------------------
    @pl.when(j == 0)
    def _():
        rowloss_ref[...] = jnp.zeros_like(rowloss_ref)
        cand_ref[...] = jnp.full(cand_ref.shape, _I32_MIN, jnp.int32)

    f = feat_ref[...]                      # (tm, d)  native dtype (f32 or bf16)
    ct = cent_t_ref[...]                   # (d, tn)  pre-transposed centers
    pos = pos_ref[...]                     # (tm, 1)  int32
    fn = fn_ref[...]                       # (tm, 1)  f32, precomputed ||f||^2
    cn = cn_ref[...]                       # (1, tn)  f32, precomputed ||c||^2

    # dist = ||f||^2 + ||c||^2 - 2 f c^T  (matmul on the MXU in the input dtype,
    # accumulation + elementwise path in f32; no in-kernel transpose/norms).
    prod = lax.dot_general(f, ct, (((1,), (0,)), ((), ())),
                           preferred_element_type=jnp.float32)      # (tm, tn)
    dist = fn + cn - 2.0 * prod

    tm, tn = dist.shape
    cols = lax.broadcasted_iota(jnp.int32, (tm, tn), 1) + j * tile_n  # global col
    self_mask = cols == pos

    # p computed ONCE (single EUP exp pass); reused by y and by the top-k merge.
    p = jnp.exp(jnp.float32(-scale) * dist)
    p = jnp.where(self_mask, 0.0, p)

    # streaming y accumulator: row-sum of p via an MXU ones-matvec instead of a
    # cross-lane XLU reduce (XLU is the binding unit in this kernel).
    ones = jnp.ones((tn, 1), jnp.float32)
    psum = lax.dot_general(p, ones, (((1,), (0,)), ((), ())),
                           preferred_element_type=jnp.float32)       # (tm, 1)
    rowloss_ref[...] = rowloss_ref[...] + psum

    # fused (value, column) keys: non-negative f32 bit patterns order like the
    # floats, so replacing the low col_bits with (lo_mask - global_col) gives a
    # single int32 key whose max is simultaneously the arg-max of p with a
    # smaller-column tie break.  Self column gets INT32_MIN -> never selected.
    pbits = pltpu.bitcast(p, jnp.int32)
    key_tile = (pbits & jnp.int32(hi_mask)) | (jnp.int32(lo_mask) - cols)
    key_tile = jnp.where(self_mask, neg, key_tile)

    cand = cand_ref[...]                                  # (tm, 128) int32 keys
    work = key_tile                                       # (tm, tn)
    slot = lax.broadcasted_iota(jnp.int32, (tm, 128), 1)  # hoisted out of k-loop
    new_keys = jnp.full((tm, 128), _I32_MIN, jnp.int32)

    use_fold = (tn % 128 == 0)
    n_groups = tn // 128

    def lane_fold(w, c):
        # element-wise max across lane groups + the candidate slab: pure VALU,
        # no lane movement; the cross-lane max afterwards only touches 128 lanes.
        folded = c
        for g in range(n_groups):
            folded = jnp.maximum(folded, w[:, g * 128:(g + 1) * 128])
        return folded

    if use_fold:
        folded = lane_fold(work, cand)
        for jj in range(k):
            best = jnp.max(folded, axis=1, keepdims=True)        # 128-lane XLU max
            new_keys = jnp.where(slot == jj, best, new_keys)
            work = jnp.where(work == best, neg, work)            # keys unique per column
            cand = jnp.where(cand == best, neg, cand)
            folded = lane_fold(work, cand)                       # VALU re-fold
    else:
        # tile_n == n and not a multiple of 128: fall back to full cross-lane max.
        for jj in range(k):
            best = jnp.maximum(jnp.max(work, axis=1, keepdims=True),
                               jnp.max(cand, axis=1, keepdims=True))
            new_keys = jnp.where(slot == jj, best, new_keys)
            work = jnp.where(work == best, neg, work)
            cand = jnp.where(cand == best, neg, cand)

    is_last = j == n_tiles - 1

    @pl.when(jnp.logical_not(is_last))
    def _():
        cand_ref[...] = new_keys           # single unmasked 128-lane store per tile

    @pl.when(is_last)
    def _():
        valid = new_keys >= 0              # lanes >= k and "no candidate" stay invalid
        col = jnp.int32(lo_mask) - (new_keys & jnp.int32(lo_mask))
        pv = pltpu.bitcast(new_keys & jnp.int32(hi_mask), jnp.float32)
        pv = jnp.where(valid, pv, 0.0)
        x = jnp.log(jnp.sum(pv, axis=1, keepdims=True))             # (tm, 1)
        y = jnp.log(rowloss_ref[...])                               # full y sum
        rowloss_ref[...] = -x + y
        # map original column -> index within the (n-1) "filtered" columns,
        # matching dist_map[mask].view(m, -1).sort() index semantics.
        fidx = col - (col > pos).astype(jnp.int32)
        fidx = jnp.where(valid, fidx, 0)
        idx_ref[...] = fidx[:, :k]         # written exactly once per m-block


def _choose_tile(total, unit, target):
    """Largest multiple of `unit` dividing `total` and <= target, else `total`."""
    if total <= target:
        return total
    t = (target // unit) * unit
    while t >= unit:
        if total % t == 0:
            return t
        t -= unit
    # TODO(synk): pad n (with p == 0 padding columns) / m when no aligned tile
    # divides them instead of falling back to one full-width block.
    return total


def pedal_forward(feature, centers, position, mem_vid, mem_camid, vid, camid,
                  scale=10, k=10, tile_m=None, tile_n=None):
    m, d = feature.shape
    n = centers.shape[0]
    assert k <= n - 1, "Pedal requires k <= n-1 (k non-self candidates per row)"
    assert k <= 128, "top-k candidate slab is one 128-lane vreg column group"

    if tile_n is None:
        # lane-dense dist/p tiles; with the lane-fold merge larger n-tiles only
        # cost VALU (which has slack) and amortize per-grid-step overhead.
        tile_n = _choose_tile(n, 128, 1024)
    if tile_m is None:
        # cap the working set of the k-extraction loop (bounds spill / vst
        # traffic, esp. v5e) and keep >= 2 parallel m-blocks for v7x's 2 TCs.
        cap = 32 if tile_n <= 256 else 16
        tile_m = _choose_tile(m, 8, min(cap, max(8, m // 2)))
    assert m % tile_m == 0 and n % tile_n == 0

    col_bits = max(1, int(n - 1).bit_length())   # bits to embed the global column
    assert col_bits <= 18, (
        "fused value+column key would truncate too many mantissa bits; "
        "n is too large for this top-k encoding")

    pos2d = position.reshape(m, 1).astype(jnp.int32)
    centers_t = centers.T                                       # (d, n), one-time
    c32 = centers.astype(jnp.float32)
    cn = jnp.sum(c32 * c32, axis=1)[None, :]                    # (1, n) f32
    f32 = feature.astype(jnp.float32)
    fn = jnp.sum(f32 * f32, axis=1, keepdims=True)              # (m, 1) f32

    grid = (m // tile_m, n // tile_n)
    kernel = functools.partial(_pedal_kernel, scale=float(scale), k=int(k),
                               tile_n=int(tile_n), col_bits=int(col_bits))

    # VMEM footprint estimate (double-buffered inputs + f32 work tiles), clamped
    # well under v7x's 64 MiB per-TC VMEM.
    itemsize = jnp.dtype(feature.dtype).itemsize
    est = (2 * tile_n * d * itemsize          # centers^T tile (double-buffered)
           + 2 * tile_m * d * itemsize        # feature tile
           + 2 * tile_n * 4 + 6 * tile_m * 4  # cn, fn, pos, rowloss, idx
           + tile_m * 128 * 4                 # candidate scratch
           + 8 * tile_m * tile_n * 4)         # dist/p/key/work/fold + spill slack
    vmem_limit = int(min(48 * 1024 * 1024, max(4 * 1024 * 1024, 2 * est)))

    rowloss, fidx = pl.pallas_call(
        kernel,
        grid=grid,
        in_specs=[
            pl.BlockSpec((tile_m, d), lambda i, j: (i, 0)),   # resident across j
            pl.BlockSpec((d, tile_n), lambda i, j: (0, j)),   # streamed / pipelined
            pl.BlockSpec((1, tile_n), lambda i, j: (0, j)),   # ||c||^2 slice
            pl.BlockSpec((tile_m, 1), lambda i, j: (i, 0)),   # ||f||^2 slice
            pl.BlockSpec((tile_m, 1), lambda i, j: (i, 0)),   # own-center position
        ],
        out_specs=(
            pl.BlockSpec((tile_m, 1), lambda i, j: (i, 0)),   # per-row (-x + y)
            pl.BlockSpec((tile_m, k), lambda i, j: (i, 0)),   # filtered top-k indices
        ),
        out_shape=(
            jax.ShapeDtypeStruct((m, 1), jnp.float32),
            jax.ShapeDtypeStruct((m, k), jnp.int32),
        ),
        scratch_shapes=[pltpu.VMEM((tile_m, 128), jnp.int32)],  # running top-k keys
        compiler_params=pltpu.CompilerParams(
            dimension_semantics=("parallel", "arbitrary"),
            vmem_limit_bytes=vmem_limit,
        ),
    )(feature, centers_t, cn, fn, pos2d)

    # scalar epilogue exactly as in the reference: sum, /d, nan-fix, /m
    l = jnp.sum(rowloss) / jnp.float32(d)
    l = jnp.where(jnp.isnan(l), jnp.float32(0.0), l)
    loss = l / jnp.float32(m)

    # pos_vid = PatchMemory.vid[index[:, :k]]  (glue gather; pos_camid / flag
    # are computed in the reference but never used for the returned values).
    pos_vid = jnp.take(mem_vid, fidx, axis=0)
    all_posvid = [pos_vid]
    return loss, all_posvid


def _reference_loss(feature, centers, position, scale, k):
    # pure-JAX replica of the PyTorch math for a correctness check
    f = feature.astype(jnp.float32)
    c = centers.astype(jnp.float32)
    m, d = f.shape
    n = c.shape[0]
    dist = (jnp.sum(f * f, 1, keepdims=True) + jnp.sum(c * c, 1, keepdims=True).T
            - 2.0 * f @ c.T)
    cols = jnp.arange(n)[None, :]
    dmask = jnp.where(cols == position[:, None], jnp.inf, dist)
    neg = jnp.sort(dmask, axis=1)[:, :n - 1]
    x = jnp.log(jnp.sum(jnp.exp(-scale * neg[:, :k]), axis=1))
    y = jnp.log(jnp.sum(jnp.exp(-scale * neg), axis=1))
    l = jnp.sum(-x + y) / d
    l = jnp.where(jnp.isnan(l), 0.0, l)
    return l / m


if __name__ == "__main__":
    m, d, n = 16, 64, 512      # batch of part-features, feature dim, memory slots
    scale, k = 10, 10          # module defaults

    key = jax.random.PRNGKey(0)
    kf, kc, kp, kv, kcam, kbv, kbc = jax.random.split(key, 7)

    feature = jax.random.normal(kf, (m, d), jnp.float32)
    feature = feature / jnp.linalg.norm(feature, axis=1, keepdims=True)
    centers = jax.random.normal(kc, (n, d), jnp.float32)
    centers = centers / jnp.linalg.norm(centers, axis=1, keepdims=True)

    position = jax.random.randint(kp, (m,), 0, n, jnp.int32)     # own-center index
    mem_vid = jax.random.randint(kv, (n,), 0, 100, jnp.int32)    # PatchMemory.vid
    mem_camid = jax.random.randint(kcam, (n,), 0, 6, jnp.int32)  # PatchMemory.camid
    vid = jax.random.randint(kbv, (m,), 0, 100, jnp.int32)
    camid = jax.random.randint(kbc, (m,), 0, 6, jnp.int32)

    ref = _reference_loss(feature, centers, position, scale, k)

    # tiled config: grid (m/8, n/128) exercises the streaming top-k merge with
    # one 128-lane group per tile, the parallel m axis (2 blocks) and the
    # arbitrary n reduction axis (4 tiles).
    loss_t, posvid_t = pedal_forward(feature, centers, position, mem_vid,
                                     mem_camid, vid, camid, scale=scale, k=k,
                                     tile_m=8, tile_n=128)
    # auto-tiled config (here a single (8, 512) block per m-tile, 4 lane groups
    # in the fold) must agree as well.
    loss_a, posvid_a = pedal_forward(feature, centers, position, mem_vid,
                                     mem_camid, vid, camid, scale=scale, k=k)

    loss_t = jax.block_until_ready(loss_t)
    loss_a = jax.block_until_ready(loss_a)
    pv_t = jax.block_until_ready(posvid_t[0])
    pv_a = jax.block_until_ready(posvid_a[0])

    assert pv_t.shape == (m, k) and pv_a.shape == (m, k)
    assert jnp.allclose(loss_t, ref, rtol=1e-4, atol=1e-4), (loss_t, ref)
    assert jnp.allclose(loss_a, ref, rtol=1e-4, atol=1e-4), (loss_a, ref)
    assert jnp.allclose(loss_t, loss_a, rtol=1e-4, atol=1e-4), (loss_t, loss_a)
    print("KERNEL_OK")
</pallas_src>

<mosaic_0001>
module attributes {stable_mosaic.version = 11 : i64} {
  func.func @_pedal_kernel(%arg0: i32, %arg1: i32, %arg2: memref<8x64xf32, #tpu.memory_space<vmem>>, %arg3: memref<64x128xf32, #tpu.memory_space<vmem>>, %arg4: memref<1x128xf32, #tpu.memory_space<vmem>>, %arg5: memref<8x1xf32, #tpu.memory_space<vmem>>, %arg6: memref<8x1xi32, #tpu.memory_space<vmem>>, %arg7: memref<8x1xf32, #tpu.memory_space<vmem>>, %arg8: memref<8x10xi32, #tpu.memory_space<vmem>>, %arg9: memref<8x128xi32, #tpu.memory_space<vmem>>) attributes {dimension_semantics = [#tpu.dimension_semantics<parallel>, #tpu.dimension_semantics<arbitrary>], iteration_bounds = array<i64: 2, 4>, scalar_prefetch = 0 : i64, scratch_operands = 1 : i64, tpu.core_type = #tpu.core_type<tc>, window_params = [{transform_indices = @transform_0, window_bounds = array<i64: 8, 64>}, {transform_indices = @transform_1, window_bounds = array<i64: 64, 128>}, {transform_indices = @transform_2, window_bounds = array<i64: 1, 128>}, {transform_indices = @transform_3, window_bounds = array<i64: 8, 1>}, {transform_indices = @transform_4, window_bounds = array<i64: 8, 1>}, {transform_indices = @transform_5, window_bounds = array<i64: 8, 1>}, {transform_indices = @transform_6, window_bounds = array<i64: 8, 10>}]} {
    %c0_i32 = arith.constant 0 : i32
    %0 = arith.cmpi eq, %arg1, %c0_i32 : i32
    %1 = arith.extui %0 : i1 to i32
    %c0_i32_0 = arith.constant 0 : i32
    %2 = arith.cmpi ne, %1, %c0_i32_0 : i32
    scf.if %2 {
      %cst_54 = arith.constant 0.000000e+00 : f32
      %200 = vector.broadcast %cst_54 : f32 to vector<8x1xf32>
      %c0_55 = arith.constant 0 : index
      %c0_56 = arith.constant 0 : index
      %201 = vector.load %arg7[%c0_55, %c0_56] : memref<8x1xf32, #tpu.memory_space<vmem>>, vector<8x1xf32>
      tpu.vector_store %arg7[%c0_55, %c0_56], %200 {strides = array<i32>} : memref<8x1xf32, #tpu.memory_space<vmem>>, vector<8x1xf32>,
      %c-2147483648_i32_57 = arith.constant -2147483648 : i32
      %202 = vector.broadcast %c-2147483648_i32_57 : i32 to vector<8x128xi32>
      %c0_58 = arith.constant 0 : index
      %c0_59 = arith.constant 0 : index
      %203 = vector.load %arg9[%c0_58, %c0_59] : memref<8x128xi32, #tpu.memory_space<vmem>>, vector<8x128xi32>
      tpu.vector_store %arg9[%c0_58, %c0_59], %202 {strides = array<i32>} : memref<8x128xi32, #tpu.memory_space<vmem>>, vector<8x128xi32>,
    } else {
    }
    %c0 = arith.constant 0 : index
    %c0_1 = arith.constant 0 : index
    %3 = vector.load %arg2[%c0, %c0_1] : memref<8x64xf32, #tpu.memory_space<vmem>>, vector<8x64xf32>
    %c0_2 = arith.constant 0 : index
    %c0_3 = arith.constant 0 : index
    %4 = vector.load %arg3[%c0_2, %c0_3] : memref<64x128xf32, #tpu.memory_space<vmem>>, vector<64x128xf32>
    %c0_4 = arith.constant 0 : index
    %c0_5 = arith.constant 0 : index
    %5 = vector.load %arg6[%c0_4, %c0_5] : memref<8x1xi32, #tpu.memory_space<vmem>>, vector<8x1xi32>
    %c0_6 = arith.constant 0 : index
    %c0_7 = arith.constant 0 : index
    %6 = vector.load %arg5[%c0_6, %c0_7] : memref<8x1xf32, #tpu.memory_space<vmem>>, vector<8x1xf32>
    %c0_8 = arith.constant 0 : index
    %c0_9 = arith.constant 0 : index
    %7 = vector.load %arg4[%c0_8, %c0_9] : memref<1x128xf32, #tpu.memory_space<vmem>>, vector<1x128xf32>
    %cst = arith.constant dense<0.000000e+00> : vector<8x128xf32>
    %8 = tpu.matmul %3, %4, %cst {dimension_numbers = #tpu.dot_dimension_numbers<[1], [0], [0], [1], [0, 0, 1, 1], [], []>} : vector<8x64xf32>, vector<64x128xf32>, vector<8x128xf32> -> vector<8x128xf32>
    %9 = vector.broadcast %6 : vector<8x1xf32> to vector<8x128xf32>
    %10 = vector.broadcast %7 : vector<1x128xf32> to vector<8x128xf32>
    %11 = arith.addf %9, %10 : vector<8x128xf32>
    %cst_10 = arith.constant 2.000000e+00 : f32
    %12 = vector.broadcast %cst_10 : f32 to vector<8x128xf32>
    %13 = arith.mulf %12, %8 : vector<8x128xf32>
    %14 = arith.subf %11, %13 : vector<8x128xf32>
    %15 = tpu.iota {dimensions = array<i32: 1>} : vector<8x128xi32>
    %c128_i32 = arith.constant 128 : i32
    %16 = arith.muli %arg1, %c128_i32 : i32
    %17 = vector.broadcast %16 : i32 to vector<8x128xi32>
    %18 = arith.addi %15, %17 : vector<8x128xi32>
    %19 = vector.broadcast %5 : vector<8x1xi32> to vector<8x128xi32>
    %20 = arith.cmpi eq, %18, %19 : vector<8x128xi32>
    %cst_11 = arith.constant -1.000000e+01 : f32
    %21 = vector.broadcast %cst_11 : f32 to vector<8x128xf32>
    %22 = arith.mulf %21, %14 : vector<8x128xf32>
    %23 = math.exp %22 : vector<8x128xf32>
    %cst_12 = arith.constant 0.000000e+00 : f32
    %24 = vector.broadcast %cst_12 : f32 to vector<8x128xf32>
    %25 = arith.select %20, %24, %23 : vector<8x128xi1>, vector<8x128xf32>
    %cst_13 = arith.constant 1.000000e+00 : f32
    %26 = vector.broadcast %cst_13 : f32 to vector<128x1xf32>
    %cst_14 = arith.constant dense<0.000000e+00> : vector<8x1xf32>
    %27 = tpu.matmul %25, %26, %cst_14 {dimension_numbers = #tpu.dot_dimension_numbers<[1], [0], [0], [1], [0, 0, 1, 1], [], []>} : vector<8x128xf32>, vector<128x1xf32>, vector<8x1xf32> -> vector<8x1xf32>
    %c0_15 = arith.constant 0 : index
    %c0_16 = arith.constant 0 : index
    %28 = vector.load %arg7[%c0_15, %c0_16] : memref<8x1xf32, #tpu.memory_space<vmem>>, vector<8x1xf32>
    %29 = arith.addf %28, %27 : vector<8x1xf32>
    %c0_17 = arith.constant 0 : index
    %c0_18 = arith.constant 0 : index
    %30 = vector.load %arg7[%c0_17, %c0_18] : memref<8x1xf32, #tpu.memory_space<vmem>>, vector<8x1xf32>
    tpu.vector_store %arg7[%c0_17, %c0_18], %29 {strides = array<i32>} : memref<8x1xf32, #tpu.memory_space<vmem>>, vector<8x1xf32>,
    %31 = tpu.bitcast %25 : vector<8x128xf32> -> vector<8x128xi32>
    %c-512_i32 = arith.constant -512 : i32
    %32 = vector.broadcast %c-512_i32 : i32 to vector<8x128xi32>
    %33 = arith.andi %31, %32 : vector<8x128xi32>
    %c511_i32 = arith.constant 511 : i32
    %34 = vector.broadcast %c511_i32 : i32 to vector<8x128xi32>
    %35 = arith.subi %34, %18 : vector<8x128xi32>
    %36 = arith.ori %33, %35 : vector<8x128xi32>
    %c-2147483648_i32 = arith.constant -2147483648 : i32
    %37 = vector.broadcast %c-2147483648_i32 : i32 to vector<8x128xi32>
    %38 = arith.select %20, %37, %36 : vector<8x128xi1>, vector<8x128xi32>
    %c0_19 = arith.constant 0 : index
    %c0_20 = arith.constant 0 : index
    %39 = vector.load %arg9[%c0_19, %c0_20] : memref<8x128xi32, #tpu.memory_space<vmem>>, vector<8x128xi32>
    %40 = tpu.iota {dimensions = array<i32: 1>} : vector<8x128xi32>
    %c-2147483648_i32_21 = arith.constant -2147483648 : i32
    %41 = vector.broadcast %c-2147483648_i32_21 : i32 to vector<8x128xi32>
    %42 = arith.maxsi %39, %38 : vector<8x128xi32>
    %cst_22 = arith.constant dense<-2147483648> : vector<8xi32>
    %43 = vector.multi_reduction <maxsi>, %42, %cst_22 [1] : vector<8x128xi32> to vector<8xi32>
    %44 = vector.shape_cast %43 : vector<8xi32> to vector<8x1xi32>
    %c0_i32_23 = arith.constant 0 : i32
    %45 = vector.broadcast %c0_i32_23 : i32 to vector<8x128xi32>
    %46 = arith.cmpi eq, %40, %45 : vector<8x128xi32>
    %47 = vector.shape_cast %44 : vector<8x1xi32> to vector<8x1xi32>
    %48 = vector.broadcast %47 : vector<8x1xi32> to vector<8x128xi32>
    %49 = arith.select %46, %48, %41 : vector<8x128xi1>, vector<8x128xi32>
    %50 = vector.broadcast %44 : vector<8x1xi32> to vector<8x128xi32>
    %51 = arith.cmpi eq, %38, %50 : vector<8x128xi32>
    %c-2147483648_i32_24 = arith.constant -2147483648 : i32
    %52 = vector.broadcast %c-2147483648_i32_24 : i32 to vector<8x128xi32>
    %53 = arith.select %51, %52, %38 : vector<8x128xi1>, vector<8x128xi32>
    %54 = vector.broadcast %44 : vector<8x1xi32> to vector<8x128xi32>
    %55 = arith.cmpi eq, %39, %54 : vector<8x128xi32>
    %c-2147483648_i32_25 = arith.constant -2147483648 : i32
    %56 = vector.broadcast %c-2147483648_i32_25 : i32 to vector<8x128xi32>
    %57 = arith.select %55, %56, %39 : vector<8x128xi1>, vector<8x128xi32>
    %58 = arith.maxsi %57, %53 : vector<8x128xi32>
    %cst_26 = arith.constant dense<-2147483648> : vector<8xi32>
    %59 = vector.multi_reduction <maxsi>, %58, %cst_26 [1] : vector<8x128xi32> to vector<8xi32>
    %60 = vector.shape_cast %59 : vector<8xi32> to vector<8x1xi32>
    %c1_i32 = arith.constant 1 : i32
    %61 = vector.broadcast %c1_i32 : i32 to vector<8x128xi32>
    %62 = arith.cmpi eq, %40, %61 : vector<8x128xi32>
    %63 = vector.shape_cast %60 : vector<8x1xi32> to vector<8x1xi32>
    %64 = vector.broadcast %63 : vector<8x1xi32> to vector<8x128xi32>
    %65 = arith.select %62, %64, %49 : vector<8x128xi1>, vector<8x128xi32>
    %66 = vector.broadcast %60 : vector<8x1xi32> to vector<8x128xi32>
    %67 = arith.cmpi eq, %53, %66 : vector<8x128xi32>
    %c-2147483648_i32_27 = arith.constant -2147483648 : i32
    %68 = vector.broadcast %c-2147483648_i32_27 : i32 to vector<8x128xi32>
    %69 = arith.select %67, %68, %53 : vector<8x128xi1>, vector<8x128xi32>
    %70 = vector.broadcast %60 : vector<8x1xi32> to vector<8x128xi32>
    %71 = arith.cmpi eq, %57, %70 : vector<8x128xi32>
    %c-2147483648_i32_28 = arith.constant -2147483648 : i32
    %72 = vector.broadcast %c-2147483648_i32_28 : i32 to vector<8x128xi32>
    %73 = arith.select %71, %72, %57 : vector<8x128xi1>, vector<8x128xi32>
    %74 = arith.maxsi %73, %69 : vector<8x128xi32>
    %cst_29 = arith.constant dense<-2147483648> : vector<8xi32>
    %75 = vector.multi_reduction <maxsi>, %74, %cst_29 [1] : vector<8x128xi32> to vector<8xi32>
    %76 = vector.shape_cast %75 : vector<8xi32> to vector<8x1xi32>
    %c2_i32 = arith.constant 2 : i32
    %77 = vector.broadcast %c2_i32 : i32 to vector<8x128xi32>
    %78 = arith.cmpi eq, %40, %77 : vector<8x128xi32>
    %79 = vector.shape_cast %76 : vector<8x1xi32> to vector<8x1xi32>
    %80 = vector.broadcast %79 : vector<8x1xi32> to vector<8x128xi32>
    %81 = arith.select %78, %80, %65 : vector<8x128xi1>, vector<8x128xi32>
    %82 = vector.broadcast %76 : vector<8x1xi32> to vector<8x128xi32>
    %83 = arith.cmpi eq, %69, %82 : vector<8x128xi32>
    %c-2147483648_i32_30 = arith.constant -2147483648 : i32
    %84 = vector.broadcast %c-2147483648_i32_30 : i32 to vector<8x128xi32>
    %85 = arith.select %83, %84, %69 : vector<8x128xi1>, vector<8x128xi32>
    %86 = vector.broadcast %76 : vector<8x1xi32> to vector<8x128xi32>
    %87 = arith.cmpi eq, %73, %86 : vector<8x128xi32>
    %c-2147483648_i32_31 = arith.constant -2147483648 : i32
    %88 = vector.broadcast %c-2147483648_i32_31 : i32 to vector<8x128xi32>
    %89 = arith.select %87, %88, %73 : vector<8x128xi1>, vector<8x128xi32>
    %90 = arith.maxsi %89, %85 : vector<8x128xi32>
    %cst_32 = arith.constant dense<-2147483648> : vector<8xi32>
    %91 = vector.multi_reduction <maxsi>, %90, %cst_32 [1] : vector<8x128xi32> to vector<8xi32>
    %92 = vector.shape_cast %91 : vector<8xi32> to vector<8x1xi32>
    %c3_i32 = arith.constant 3 : i32
    %93 = vector.broadcast %c3_i32 : i32 to vector<8x128xi32>
    %94 = arith.cmpi eq, %40, %93 : vector<8x128xi32>
    %95 = vector.shape_cast %92 : vector<8x1xi32> to vector<8x1xi32>
    %96 = vector.broadcast %95 : vector<8x1xi32> to vector<8x128xi32>
    %97 = arith.select %94, %96, %81 : vector<8x128xi1>, vector<8x128xi32>
    %98 = vector.broadcast %92 : vector<8x1xi32> to vector<8x128xi32>
    %99 = arith.cmpi eq, %85, %98 : vector<8x128xi32>
    %c-2147483648_i32_33 = arith.constant -2147483648 : i32
    %100 = vector.broadcast %c-2147483648_i32_33 : i32 to vector<8x128xi32>
    %101 = arith.select %99, %100, %85 : vector<8x128xi1>, vector<8x128xi32>
    %102 = vector.broadcast %92 : vector<8x1xi32> to vector<8x128xi32>
    %103 = arith.cmpi eq, %89, %102 : vector<8x128xi32>
    %c-2147483648_i32_34 = arith.constant -2147483648 : i32
    %104 = vector.broadcast %c-2147483648_i32_34 : i32 to vector<8x128xi32>
    %105 = arith.select %103, %104, %89 : vector<8x128xi1>, vector<8x128xi32>
    %106 = arith.maxsi %105, %101 : vector<8x128xi32>
    %cst_35 = arith.constant dense<-2147483648> : vector<8xi32>
    %107 = vector.multi_reduction <maxsi>, %106, %cst_35 [1] : vector<8x128xi32> to vector<8xi32>
    %108 = vector.shape_cast %107 : vector<8xi32> to vector<8x1xi32>
    %c4_i32 = arith.constant 4 : i32
    %109 = vector.broadcast %c4_i32 : i32 to vector<8x128xi32>
    %110 = arith.cmpi eq, %40, %109 : vector<8x128xi32>
    %111 = vector.shape_cast %108 : vector<8x1xi32> to vector<8x1xi32>
    %112 = vector.broadcast %111 : vector<8x1xi32> to vector<8x128xi32>
    %113 = arith.select %110, %112, %97 : vector<8x128xi1>, vector<8x128xi32>
    %114 = vector.broadcast %108 : vector<8x1xi32> to vector<8x128xi32>
    %115 = arith.cmpi eq, %101, %114 : vector<8x128xi32>
    %c-2147483648_i32_36 = arith.constant -2147483648 : i32
    %116 = vector.broadcast %c-2147483648_i32_36 : i32 to vector<8x128xi32>
    %117 = arith.select %115, %116, %101 : vector<8x128xi1>, vector<8x128xi32>
    %118 = vector.broadcast %108 : vector<8x1xi32> to vector<8x128xi32>
    %119 = arith.cmpi eq, %105, %118 : vector<8x128xi32>
    %c-2147483648_i32_37 = arith.constant -2147483648 : i32
    %120 = vector.broadcast %c-2147483648_i32_37 : i32 to vector<8x128xi32>
    %121 = arith.select %119, %120, %105 : vector<8x128xi1>, vector<8x128xi32>
    %122 = arith.maxsi %121, %117 : vector<8x128xi32>
    %cst_38 = arith.constant dense<-2147483648> : vector<8xi32>
    %123 = vector.multi_reduction <maxsi>, %122, %cst_38 [1] : vector<8x128xi32> to vector<8xi32>
    %124 = vector.shape_cast %123 : vector<8xi32> to vector<8x1xi32>
    %c5_i32 = arith.constant 5 : i32
    %125 = vector.broadcast %c5_i32 : i32 to vector<8x128xi32>
    %126 = arith.cmpi eq, %40, %125 : vector<8x128xi32>
    %127 = vector.shape_cast %124 : vector<8x1xi32> to vector<8x1xi32>
    %128 = vector.broadcast %127 : vector<8x1xi32> to vector<8x128xi32>
    %129 = arith.select %126, %128, %113 : vector<8x128xi1>, vector<8x128xi32>
    %130 = vector.broadcast %124 : vector<8x1xi32> to vector<8x128xi32>
    %131 = arith.cmpi eq, %117, %130 : vector<8x128xi32>
    %c-2147483648_i32_39 = arith.constant -2147483648 : i32
    %132 = vector.broadcast %c-2147483648_i32_39 : i32 to vector<8x128xi32>
    %133 = arith.select %131, %132, %117 : vector<8x128xi1>, vector<8x128xi32>
    %134 = vector.broadcast %124 : vector<8x1xi32> to vector<8x128xi32>
    %135 = arith.cmpi eq, %121, %134 : vector<8x128xi32>
    %c-2147483648_i32_40 = arith.constant -2147483648 : i32
    %136 = vector.broadcast %c-2147483648_i32_40 : i32 to vector<8x128xi32>
    %137 = arith.select %135, %136, %121 : vector<8x128xi1>, vector<8x128xi32>
    %138 = arith.maxsi %137, %133 : vector<8x128xi32>
    %cst_41 = arith.constant dense<-2147483648> : vector<8xi32>
    %139 = vector.multi_reduction <maxsi>, %138, %cst_41 [1] : vector<8x128xi32> to vector<8xi32>
    %140 = vector.shape_cast %139 : vector<8xi32> to vector<8x1xi32>
    %c6_i32 = arith.constant 6 : i32
    %141 = vector.broadcast %c6_i32 : i32 to vector<8x128xi32>
    %142 = arith.cmpi eq, %40, %141 : vector<8x128xi32>
    %143 = vector.shape_cast %140 : vector<8x1xi32> to vector<8x1xi32>
    %144 = vector.broadcast %143 : vector<8x1xi32> to vector<8x128xi32>
    %145 = arith.select %142, %144, %129 : vector<8x128xi1>, vector<8x128xi32>
    %146 = vector.broadcast %140 : vector<8x1xi32> to vector<8x128xi32>
    %147 = arith.cmpi eq, %133, %146 : vector<8x128xi32>
    %c-2147483648_i32_42 = arith.constant -2147483648 : i32
    %148 = vector.broadcast %c-2147483648_i32_42 : i32 to vector<8x128xi32>
    %149 = arith.select %147, %148, %133 : vector<8x128xi1>, vector<8x128xi32>
    %150 = vector.broadcast %140 : vector<8x1xi32> to vector<8x128xi32>
    %151 = arith.cmpi eq, %137, %150 : vector<8x128xi32>
    %c-2147483648_i32_43 = arith.constant -2147483648 : i32
    %152 = vector.broadcast %c-2147483648_i32_43 : i32 to vector<8x128xi32>
    %153 = arith.select %151, %152, %137 : vector<8x128xi1>, vector<8x128xi32>
    %154 = arith.maxsi %153, %149 : vector<8x128xi32>
    %cst_44 = arith.constant dense<-2147483648> : vector<8xi32>
    %155 = vector.multi_reduction <maxsi>, %154, %cst_44 [1] : vector<8x128xi32> to vector<8xi32>
    %156 = vector.shape_cast %155 : vector<8xi32> to vector<8x1xi32>
    %c7_i32 = arith.constant 7 : i32
    %157 = vector.broadcast %c7_i32 : i32 to vector<8x128xi32>
    %158 = arith.cmpi eq, %40, %157 : vector<8x128xi32>
    %159 = vector.shape_cast %156 : vector<8x1xi32> to vector<8x1xi32>
    %160 = vector.broadcast %159 : vector<8x1xi32> to vector<8x128xi32>
    %161 = arith.select %158, %160, %145 : vector<8x128xi1>, vector<8x128xi32>
    %162 = vector.broadcast %156 : vector<8x1xi32> to vector<8x128xi32>
    %163 = arith.cmpi eq, %149, %162 : vector<8x128xi32>
    %c-2147483648_i32_45 = arith.constant -2147483648 : i32
    %164 = vector.broadcast %c-2147483648_i32_45 : i32 to vector<8x128xi32>
    %165 = arith.select %163, %164, %149 : vector<8x128xi1>, vector<8x128xi32>
    %166 = vector.broadcast %156 : vector<8x1xi32> to vector<8x128xi32>
    %167 = arith.cmpi eq, %153, %166 : vector<8x128xi32>
    %c-2147483648_i32_46 = arith.constant -2147483648 : i32
    %168 = vector.broadcast %c-2147483648_i32_46 : i32 to vector<8x128xi32>
    %169 = arith.select %167, %168, %153 : vector<8x128xi1>, vector<8x128xi32>
    %170 = arith.maxsi %169, %165 : vector<8x128xi32>
    %cst_47 = arith.constant dense<-2147483648> : vector<8xi32>
    %171 = vector.multi_reduction <maxsi>, %170, %cst_47 [1] : vector<8x128xi32> to vector<8xi32>
    %172 = vector.shape_cast %171 : vector<8xi32> to vector<8x1xi32>
    %c8_i32 = arith.constant 8 : i32
    %173 = vector.broadcast %c8_i32 : i32 to vector<8x128xi32>
    %174 = arith.cmpi eq, %40, %173 : vector<8x128xi32>
    %175 = vector.shape_cast %172 : vector<8x1xi32> to vector<8x1xi32>
    %176 = vector.broadcast %175 : vector<8x1xi32> to vector<8x128xi32>
    %177 = arith.select %174, %176, %161 : vector<8x128xi1>, vector<8x128xi32>
    %178 = vector.broadcast %172 : vector<8x1xi32> to vector<8x128xi32>
    %179 = arith.cmpi eq, %165, %178 : vector<8x128xi32>
    %c-2147483648_i32_48 = arith.constant -2147483648 : i32
    %180 = vector.broadcast %c-2147483648_i32_48 : i32 to vector<8x128xi32>
    %181 = arith.select %179, %180, %165 : vector<8x128xi1>, vector<8x128xi32>
    %182 = vector.broadcast %172 : vector<8x1xi32> to vector<8x128xi32>
    %183 = arith.cmpi eq, %169, %182 : vector<8x128xi32>
    %c-2147483648_i32_49 = arith.constant -2147483648 : i32
    %184 = vector.broadcast %c-2147483648_i32_49 : i32 to vector<8x128xi32>
    %185 = arith.select %183, %184, %169 : vector<8x128xi1>, vector<8x128xi32>
    %186 = arith.maxsi %185, %181 : vector<8x128xi32>
    %cst_50 = arith.constant dense<-2147483648> : vector<8xi32>
    %187 = vector.multi_reduction <maxsi>, %186, %cst_50 [1] : vector<8x128xi32> to vector<8xi32>
    %188 = vector.shape_cast %187 : vector<8xi32> to vector<8x1xi32>
    %c9_i32 = arith.constant 9 : i32
    %189 = vector.broadcast %c9_i32 : i32 to vector<8x128xi32>
    %190 = arith.cmpi eq, %40, %189 : vector<8x128xi32>
    %191 = vector.shape_cast %188 : vector<8x1xi32> to vector<8x1xi32>
    %192 = vector.broadcast %191 : vector<8x1xi32> to vector<8x128xi32>
    %193 = arith.select %190, %192, %177 : vector<8x128xi1>, vector<8x128xi32>
    %c3_i32_51 = arith.constant 3 : i32
    %194 = arith.cmpi eq, %arg1, %c3_i32_51 : i32
    %true = arith.constant true
    %195 = arith.xori %194, %true : i1
    %196 = arith.extui %195 : i1 to i32
    %c0_i32_52 = arith.constant 0 : i32
    %197 = arith.cmpi ne, %196, %c0_i32_52 : i32
    scf.if %197 {
      %c0_54 = arith.constant 0 : index
      %c0_55 = arith.constant 0 : index
      %200 = vector.load %arg9[%c0_54, %c0_55] : memref<8x128xi32, #tpu.memory_space<vmem>>, vector<8x128xi32>
      tpu.vector_store %arg9[%c0_54, %c0_55], %193 {strides = array<i32>} : memref<8x128xi32, #tpu.memory_space<vmem>>, vector<8x128xi32>,
    } else {
    }
    %198 = arith.extui %194 : i1 to i32
    %c0_i32_53 = arith.constant 0 : i32
    %199 = arith.cmpi ne, %198, %c0_i32_53 : i32
    scf.if %199 {
      %c0_i32_54 = arith.constant 0 : i32
      %200 = vector.broadcast %c0_i32_54 : i32 to vector<8x128xi32>
      %201 = arith.cmpi sge, %193, %200 : vector<8x128xi32>
      %c511_i32_55 = arith.constant 511 : i32
      %202 = vector.broadcast %c511_i32_55 : i32 to vector<8x128xi32>
      %203 = arith.andi %193, %202 : vector<8x128xi32>
      %c511_i32_56 = arith.constant 511 : i32
      %204 = vector.broadcast %c511_i32_56 : i32 to vector<8x128xi32>
      %205 = arith.subi %204, %203 : vector<8x128xi32>
      %c-512_i32_57 = arith.constant -512 : i32
      %206 = vector.broadcast %c-512_i32_57 : i32 to vector<8x128xi32>
      %207 = arith.andi %193, %206 : vector<8x128xi32>
      %208 = tpu.bitcast %207 : vector<8x128xi32> -> vector<8x128xf32>
      %cst_58 = arith.constant 0.000000e+00 : f32
      %209 = vector.broadcast %cst_58 : f32 to vector<8x128xf32>
      %210 = arith.select %201, %208, %209 : vector<8x128xi1>, vector<8x128xf32>
      %cst_59 = arith.constant dense<0.000000e+00> : vector<8xf32>
      %211 = vector.multi_reduction <add>, %210, %cst_59 [1] : vector<8x128xf32> to vector<8xf32>
      %212 = vector.shape_cast %211 : vector<8xf32> to vector<8x1xf32>
      %213 = math.log %212 : vector<8x1xf32>
      %c0_60 = arith.constant 0 : index
      %c0_61 = arith.constant 0 : index
      %214 = vector.load %arg7[%c0_60, %c0_61] : memref<8x1xf32, #tpu.memory_space<vmem>>, vector<8x1xf32>
      %215 = math.log %214 : vector<8x1xf32>
      %cst_62 = arith.constant 0.000000e+00 : f32
      %216 = vector.broadcast %cst_62 : f32 to vector<8x1xf32>
      %217 = arith.subf %216, %213 : vector<8x1xf32>
      %218 = arith.addf %217, %215 : vector<8x1xf32>
      %c0_63 = arith.constant 0 : index
      %c0_64 = arith.constant 0 : index
      %219 = vector.load %arg7[%c0_63, %c0_64] : memref<8x1xf32, #tpu.memory_space<vmem>>, vector<8x1xf32>
      tpu.vector_store %arg7[%c0_63, %c0_64], %218 {strides = array<i32>} : memref<8x1xf32, #tpu.memory_space<vmem>>, vector<8x1xf32>,
      %220 = vector.broadcast %5 : vector<8x1xi32> to vector<8x128xi32>
      %221 = arith.cmpi sgt, %205, %220 : vector<8x128xi32>
      %222 = arith.extui %221 : vector<8x128xi1> to vector<8x128xi32>
      %223 = arith.subi %205, %222 : vector<8x128xi32>
      %c0_i32_65 = arith.constant 0 : i32
      %224 = vector.broadcast %c0_i32_65 : i32 to vector<8x128xi32>
      %225 = arith.select %201, %223, %224 : vector<8x128xi1>, vector<8x128xi32>
      %226 = vector.extract_strided_slice %225 {offsets = [0, 0], sizes = [8, 10], strides = [1, 1]} : vector<8x128xi32> to vector<8x10xi32>
      %c0_66 = arith.constant 0 : index
      %c0_67 = arith.constant 0 : index
      %227 = vector.load %arg8[%c0_66, %c0_67] : memref<8x10xi32, #tpu.memory_space<vmem>>, vector<8x10xi32>
      tpu.vector_store %arg8[%c0_66, %c0_67], %226 {strides = array<i32>} : memref<8x10xi32, #tpu.memory_space<vmem>>, vector<8x10xi32>,
    } else {
    }
    return
  }
  func.func @transform_0(%arg0: i32, %arg1: i32) -> (i32, i32) {
    %c0_i32 = arith.constant 0 : i32
    %c0_i32_0 = arith.constant 0 : i32
    return %arg0, %c0_i32 : i32, i32
  }
  func.func @transform_1(%arg0: i32, %arg1: i32) -> (i32, i32) {
    %c0_i32 = arith.constant 0 : i32
    %c0_i32_0 = arith.constant 0 : i32
    return %c0_i32, %arg1 : i32, i32
  }
  func.func @transform_2(%arg0: i32, %arg1: i32) -> (i32, i32) {
    %c0_i32 = arith.constant 0 : i32
    %c0_i32_0 = arith.constant 0 : i32
    return %c0_i32, %arg1 : i32, i32
  }
  func.func @transform_3(%arg0: i32, %arg1: i32) -> (i32, i32) {
    %c0_i32 = arith.constant 0 : i32
    %c0_i32_0 = arith.constant 0 : i32
    return %arg0, %c0_i32 : i32, i32
  }
  func.func @transform_4(%arg0: i32, %arg1: i32) -> (i32, i32) {
    %c0_i32 = arith.constant 0 : i32
    %c0_i32_0 = arith.constant 0 : i32
    return %arg0, %c0_i32 : i32, i32
  }
  func.func @transform_5(%arg0: i32, %arg1: i32) -> (i32, i32) {
    %c0_i32 = arith.constant 0 : i32
    %c0_i32_0 = arith.constant 0 : i32
    return %arg0, %c0_i32 : i32, i32
  }
  func.func @transform_6(%arg0: i32, %arg1: i32) -> (i32, i32) {
    %c0_i32 = arith.constant 0 : i32
    %c0_i32_0 = arith.constant 0 : i32
    return %arg0, %c0_i32 : i32, i32
  }
}

</mosaic_0001>

<llo_original>
// kernel: tpu_custom_call.1
$region0: #{tpu_custom_call.1}
  #allocation0 [shape = 'u32[]', space=smem, size = 0x4, offset = 0x4, fixed_abs, tag = 'smem constant byte address 0x4 - core index']
  #allocation1 [shape = 'u32[144,128]{1,0:T(1,128)}', space=vmem, size = 0x12000, scoped, tag = 'internal scratch']
  #allocation2 [shape = 's32[8,128]{1,0:T(8,128)}', space=vmem, size = 0x1000, scoped, tag = 'scratch operand']
  %s0 = inlined_call_operand.vmem [shape: f32[16,64], index: 0, kind: input, shape index: {}]
  %s1 = inlined_call_operand.hbm [shape: f32[64,512], index: 1, kind: input, shape index: {}]
  %s2 = inlined_call_operand.vmem [shape: f32[1,512], index: 2, kind: input, shape index: {}]
  %s3 = inlined_call_operand.vmem [shape: f32[16,1], index: 3, kind: input, shape index: {}]
  %s4 = inlined_call_operand.vmem [shape: s32[16,1], index: 4, kind: input, shape index: {}]
  %s5 = inlined_call_operand.vmem [shape: f32[16,1], index: 5, kind: output, shape index: {0}]
  %s6 = inlined_call_operand.hbm [shape: s32[16,10], index: 6, kind: output, shape index: {1}]
  %7 = xla_tuple %s5, %s6
  %s8 = sld [smem:[#allocation0]]
  $region77: #{tpu_custom_call.1} parent=0
    _
  %s10 = ssub.s32 1, %s8
  %s11 = scalar_select 0, %s10, %s8
  $region1: #{tpu_custom_call.1} parent=0
    #allocation3 [shape = 'u8[65536]{0}', space=vmem, size = 0x10000, scoped, tag = 'input window, operand 1']
    #allocation4 [shape = 's32[2]{0}', space=sflag, size = 0x8, scoped, tag = 'scoped memory for tpu_custom_call.1']
    #allocation5 [shape = 's32[2]{0}', space=sflag, size = 0x8, scoped, tag = 'scoped memory for tpu_custom_call.1']
    #allocation6 [shape = 'u8[8192]{0}', space=vmem, size = 0x2000, scoped, tag = 'output window, operand 1']
    %12 = vsyncpa [#allocation4], 0
    %s13 = scalar_lea.sflag [#allocation4], 1
    %14 = vsyncpa %s13, 0
    %15 = vsyncpa [#allocation5], 0
    %s16 = scalar_lea.sflag [#allocation5], 1
    %17 = vsyncpa %s16, 0
    loop: start=0, step=1, limit=10
    $region2: #{tpu_custom_call.1} parent=1 // loop_pre_header
      _
    $region3: #{tpu_custom_call.1} parent=1 // loop_header
      %s19 = sphi 0, %s23
      %p20 = scmp.ge.s32.totalorder %s19, 10
      %s26 = sphi 0, %s38
      %s27 = sphi 0, %s34
      %s28 = sphi 0, %s26
      %s29 = sphi 0, %s27
      %s30 = sphi 0, %s28
      %s31 = sphi 0, %s29
      %s41 = sphi 0, %s43
      %s44 = sphi 0, %s41
      %s45 = sphi 0, %s44
      %s61 = sphi 0, %s45
      %s67 = sphi 0, %s69
      %s70 = sphi 0, %s67
      %s71 = sphi 0, %s70
      %s87 = sphi 0, %s71
      %s93 = sphi 0, %s95
      %s96 = sphi 0, %s93
      %s97 = sphi 0, %s96
      %s113 = sphi 0, %s97
      %s119 = sphi 0, %s121
      %s122 = sphi 0, %s119
      %s123 = sphi 0, %s122
      %s139 = sphi 0, %s123
      %s145 = sphi 0, %s147
      %s148 = sphi 0, %s145
      %s149 = sphi 0, %s148
      %s165 = sphi 0, %s149
      %s171 = sphi 0, %s173
      %s174 = sphi 0, %s171
      %s175 = sphi 0, %s174
      %s191 = sphi 0, %s175
      %s197 = sphi 0, %s199
      %s200 = sphi 0, %s197
      %s201 = sphi 0, %s200
      %s217 = sphi 0, %s201
    $region4: #{tpu_custom_call.1} parent=1 // loop_header_branch
      %22 = sbr.rel (%p20) target = $region8
    $region5: #{tpu_custom_call.1} parent=1 // loop_body
      %s24 = ssub.s32 %s19, 1
      %s25 = ssub.s32 %s19, 2
      %s32 = sadd.s32 1, %s27
      %p33 = scmp.ge.s32.totalorder %s32, 4
      %s34 = scalar_select %p33, 0, %s32
      %s35 = sadd.s32 1, %s26
      %s36 = scalar_select %p33, %s35, %s26
      %p37 = scmp.ge.s32.totalorder %s36, 2
      %s38 = scalar_select %p37, 0, %s36
      %s39 = ssub.s32 %s26, %s38
      %p40 = scmp.eq.s32.totalorder %s39, 0
      %s42 = sadd.s32 %s41, 1
      %s43 = scalar_select %p40, %s41, %s42
      %p46 = pneg %p40
      %p47 = scmp.eq.s32.totalorder %s19, 7
      %p48 = por %p46, %p47
      %p49 = scmp.ne.s32.totalorder %s41, %s44
      %p50 = scmp.eq.s32.totalorder %s19, 0
      %p51 = por %p49, %p50
      %p52 = scmp.ne.s32.totalorder %s41, %s44
      %p53 = scmp.eq.s32.totalorder %s24, 7
      %p54 = por %p52, %p53
      %p55 = scmp.ne.s32.totalorder %s44, %s45
      %p56 = scmp.eq.s32.totalorder %s24, 0
      %p57 = por %p55, %p56
      %p58 = scmp.ne.s32.totalorder %s44, %s45
      %p59 = scmp.eq.s32.totalorder %s25, 7
      %p60 = por %p58, %p59
      %p62 = scmp.ne.s32.totalorder %s45, %s61
      %p63 = scmp.eq.s32.totalorder %s25, 0
      %p64 = por %p62, %p63
      %s65 = ssub.s32 %s27, %s34
      %p66 = scmp.eq.s32.totalorder %s65, 0
      %s68 = sadd.s32 %s67, 1
      %s69 = scalar_select %p66, %s67, %s68
      %p72 = pneg %p66
      %p73 = scmp.eq.s32.totalorder %s19, 7
      %p74 = por %p72, %p73
      %p75 = scmp.ne.s32.totalorder %s67, %s70
      %p76 = scmp.eq.s32.totalorder %s19, 0
      %p77 = por %p75, %p76
      %p78 = scmp.ne.s32.totalorder %s67, %s70
      %p79 = scmp.eq.s32.totalorder %s24, 7
      %p80 = por %p78, %p79
      %p81 = scmp.ne.s32.totalorder %s70, %s71
      %p82 = scmp.eq.s32.totalorder %s24, 0
      %p83 = por %p81, %p82
      %p84 = scmp.ne.s32.totalorder %s70, %s71
      %p85 = scmp.eq.s32.totalorder %s25, 7
      %p86 = por %p84, %p85
      %p88 = scmp.ne.s32.totalorder %s71, %s87
      %p89 = scmp.eq.s32.totalorder %s25, 0
      %p90 = por %p88, %p89
      %s91 = ssub.s32 %s27, %s34
      %p92 = scmp.eq.s32.totalorder %s91, 0
      %s94 = sadd.s32 %s93, 1
      %s95 = scalar_select %p92, %s93, %s94
      %p98 = pneg %p92
      %p99 = scmp.eq.s32.totalorder %s19, 7
      %p100 = por %p98, %p99
      %p101 = scmp.ne.s32.totalorder %s93, %s96
      %p102 = scmp.eq.s32.totalorder %s19, 0
      %p103 = por %p101, %p102
      %p104 = scmp.ne.s32.totalorder %s93, %s96
      %p105 = scmp.eq.s32.totalorder %s24, 7
      %p106 = por %p104, %p105
      %p107 = scmp.ne.s32.totalorder %s96, %s97
      %p108 = scmp.eq.s32.totalorder %s24, 0
      %p109 = por %p107, %p108
      %p110 = scmp.ne.s32.totalorder %s96, %s97
      %p111 = scmp.eq.s32.totalorder %s25, 7
      %p112 = por %p110, %p111
      %p114 = scmp.ne.s32.totalorder %s97, %s113
      %p115 = scmp.eq.s32.totalorder %s25, 0
      %p116 = por %p114, %p115
      %s117 = ssub.s32 %s26, %s38
      %p118 = scmp.eq.s32.totalorder %s117, 0
      %s120 = sadd.s32 %s119, 1
      %s121 = scalar_select %p118, %s119, %s120
      %p124 = pneg %p118
      %p125 = scmp.eq.s32.totalorder %s19, 7
      %p126 = por %p124, %p125
      %p127 = scmp.ne.s32.totalorder %s119, %s122
      %p128 = scmp.eq.s32.totalorder %s19, 0
      %p129 = por %p127, %p128
      %p130 = scmp.ne.s32.totalorder %s119, %s122
      %p131 = scmp.eq.s32.totalorder %s24, 7
      %p132 = por %p130, %p131
      %p133 = scmp.ne.s32.totalorder %s122, %s123
      %p134 = scmp.eq.s32.totalorder %s24, 0
      %p135 = por %p133, %p134
      %p136 = scmp.ne.s32.totalorder %s122, %s123
      %p137 = scmp.eq.s32.totalorder %s25, 7
      %p138 = por %p136, %p137
      %p140 = scmp.ne.s32.totalorder %s123, %s139
      %p141 = scmp.eq.s32.totalorder %s25, 0
      %p142 = por %p140, %p141
      %s143 = ssub.s32 %s26, %s38
      %p144 = scmp.eq.s32.totalorder %s143, 0
      %s146 = sadd.s32 %s145, 1
      %s147 = scalar_select %p144, %s145, %s146
      %p150 = pneg %p144
      %p151 = scmp.eq.s32.totalorder %s19, 7
      %p152 = por %p150, %p151
      %p153 = scmp.ne.s32.totalorder %s145, %s148
      %p154 = scmp.eq.s32.totalorder %s19, 0
      %p155 = por %p153, %p154
      %p156 = scmp.ne.s32.totalorder %s145, %s148
      %p157 = scmp.eq.s32.totalorder %s24, 7
      %p158 = por %p156, %p157
      %p159 = scmp.ne.s32.totalorder %s148, %s149
      %p160 = scmp.eq.s32.totalorder %s24, 0
      %p161 = por %p159, %p160
      %p162 = scmp.ne.s32.totalorder %s148, %s149
      %p163 = scmp.eq.s32.totalorder %s25, 7
      %p164 = por %p162, %p163
      %p166 = scmp.ne.s32.totalorder %s149, %s165
      %p167 = scmp.eq.s32.totalorder %s25, 0
      %p168 = por %p166, %p167
      %s169 = ssub.s32 %s26, %s38
      %p170 = scmp.eq.s32.totalorder %s169, 0
      %s172 = sadd.s32 %s171, 1
      %s173 = scalar_select %p170, %s171, %s172
      %p176 = pneg %p170
      %p177 = scmp.eq.s32.totalorder %s19, 7
      %p178 = por %p176, %p177
      %p179 = scmp.ne.s32.totalorder %s171, %s174
      %p180 = scmp.eq.s32.totalorder %s19, 0
      %p181 = por %p179, %p180
      %p182 = scmp.ne.s32.totalorder %s171, %s174
      %p183 = scmp.eq.s32.totalorder %s24, 7
      %p184 = por %p182, %p183
      %p185 = scmp.ne.s32.totalorder %s174, %s175
      %p186 = scmp.eq.s32.totalorder %s24, 0
      %p187 = por %p185, %p186
      %p188 = scmp.ne.s32.totalorder %s174, %s175
      %p189 = scmp.eq.s32.totalorder %s25, 7
      %p190 = por %p188, %p189
      %p192 = scmp.ne.s32.totalorder %s175, %s191
      %p193 = scmp.eq.s32.totalorder %s25, 0
      %p194 = por %p192, %p193
      %s195 = ssub.s32 %s26, %s38
      %p196 = scmp.eq.s32.totalorder %s195, 0
      %s198 = sadd.s32 %s197, 1
      %s199 = scalar_select %p196, %s197, %s198
      %p202 = pneg %p196
      %p203 = scmp.eq.s32.totalorder %s19, 7
      %p204 = por %p202, %p203
      %p205 = scmp.ne.s32.totalorder %s197, %s200
      %p206 = scmp.eq.s32.totalorder %s19, 0
      %p207 = por %p205, %p206
      %p208 = scmp.ne.s32.totalorder %s197, %s200
      %p209 = scmp.eq.s32.totalorder %s24, 7
      %p210 = por %p208, %p209
      %p211 = scmp.ne.s32.totalorder %s200, %s201
      %p212 = scmp.eq.s32.totalorder %s24, 0
      %p213 = por %p211, %p212
      %p214 = scmp.ne.s32.totalorder %s200, %s201
      %p215 = scmp.eq.s32.totalorder %s25, 7
      %p216 = por %p214, %p215
      %p218 = scmp.ne.s32.totalorder %s201, %s217
      %p219 = scmp.eq.s32.totalorder %s25, 0
      %p220 = por %p218, %p219
      %p221 = scmp.le.s32.totalorder 1, %s19
      %p222 = scmp.lt.s32.totalorder %s19, 9
      %p223 = pnand %p221, %p222
      %p224 = pneg %p223
      // Predicated region
      $region9: #{tpu_custom_call.1} parent=5 // pred_check
        _
      $region10: #{tpu_custom_call.1} parent=5 // pred_check_branch
        %226 = sbr.rel (%p223) target = $region12
      $region11: #{tpu_custom_call.1} parent=5 // pred_region
        %s227 = ssub.s32 %s19, 1
      $region12: #{tpu_custom_call.1} parent=5 // pred_fallthru
        _
      %p228 = scmp.lt.s32.totalorder %s19, 8
      // Predicated region
      $region13: #{tpu_custom_call.1} parent=5 // pred_check
        %p229 = pneg %p228
      $region14: #{tpu_custom_call.1} parent=5 // pred_check_branch
        %231 = sbr.rel (%p229) target = $region16
      $region15: #{tpu_custom_call.1} parent=5 // pred_region
        // Predicated region
        $region17: #{tpu_custom_call.1} parent=15 // pred_check
          %p232 = pneg %p51
        $region18: #{tpu_custom_call.1} parent=15 // pred_check_branch
          %234 = sbr.rel (%p232) target = $region20
        $region19: #{tpu_custom_call.1} parent=15 // pred_region
          %p235 = scmp.lt.s32.totalorder %s26, 1
          %s236 = scalar_select %p235, %s26, 1
          %s237 = smul.addr %s236, 8
          %s238 = scalar_lea.vmem %s0, %s237
        $region20: #{tpu_custom_call.1} parent=15 // pred_fallthru
          _
        // Predicated region
        $region21: #{tpu_custom_call.1} parent=15 // pred_check
          %p239 = pneg %p77
        $region22: #{tpu_custom_call.1} parent=15 // pred_check_branch
          %241 = sbr.rel (%p239) target = $region24
        $region23: #{tpu_custom_call.1} parent=15 // pred_region
          %s242 = sand.u32 %s67, 1
          %s243 = scalar_lea.sflag [#allocation4], %s242
          %s244 = sand.u32 %s67, 1
          %s245 = smul.addr %s244, 64
          %s246 = scalar_lea.vmem [#allocation3], %s245
          %s248 = ssub.s32 1024, 1024
          %249 = vsyncadd %s243, %s248
          %s250 = smul.addr %s27, 128
          %s251 = scalar_lea.hbm %s1, %s250
          %s252 = sshll.u32 %s246, 4
          %s253 = int_to_ptr.vmem [resolvable:$true] %s252
          %258 = dma.hbm_to_vmem [thread:$0]  %s251, 1024, %s253, %s243, 512, 128, 8
        $region24: #{tpu_custom_call.1} parent=15 // pred_fallthru
          _
        // Predicated region
        $region25: #{tpu_custom_call.1} parent=15 // pred_check
          %p259 = pneg %p103
        $region26: #{tpu_custom_call.1} parent=15 // pred_check_branch
          %261 = sbr.rel (%p259) target = $region28
        $region27: #{tpu_custom_call.1} parent=15 // pred_region
          %p262 = scmp.lt.s32.totalorder %s27, 3
          %s263 = scalar_select %p262, %s27, 3
          %s264 = scalar_lea.vmem %s2, %s263
        $region28: #{tpu_custom_call.1} parent=15 // pred_fallthru
          _
        // Predicated region
        $region29: #{tpu_custom_call.1} parent=15 // pred_check
          %p265 = pneg %p129
        $region30: #{tpu_custom_call.1} parent=15 // pred_check_branch
          %267 = sbr.rel (%p265) target = $region32
        $region31: #{tpu_custom_call.1} parent=15 // pred_region
          %p268 = scmp.lt.s32.totalorder %s26, 1
          %s269 = scalar_select %p268, %s26, 1
          %s270 = smul.addr %s269, 8
          %s271 = scalar_lea.vmem %s3, %s270
        $region32: #{tpu_custom_call.1} parent=15 // pred_fallthru
          _
        // Predicated region
        $region33: #{tpu_custom_call.1} parent=15 // pred_check
          %p272 = pneg %p155
        $region34: #{tpu_custom_call.1} parent=15 // pred_check_branch
          %274 = sbr.rel (%p272) target = $region36
        $region35: #{tpu_custom_call.1} parent=15 // pred_region
          %p275 = scmp.lt.s32.totalorder %s26, 1
          %s276 = scalar_select %p275, %s26, 1
          %s277 = smul.addr %s276, 8
          %s278 = scalar_lea.vmem %s4, %s277
        $region36: #{tpu_custom_call.1} parent=15 // pred_fallthru
          _
      $region16: #{tpu_custom_call.1} parent=5 // pred_fallthru
        _
      %p279 = scmp.le.s32.totalorder 1, %s19
      %p280 = scmp.lt.s32.totalorder %s19, 9
      %p281 = pnand %p279, %p280
      %p282 = pneg %p281
      // Predicated region
      $region37: #{tpu_custom_call.1} parent=5 // pred_check
        _
      $region38: #{tpu_custom_call.1} parent=5 // pred_check_branch
        %284 = sbr.rel (%p281) target = $region40
      $region39: #{tpu_custom_call.1} parent=5 // pred_region
        %s285 = ssub.s32 %s19, 1
        %s286 = sand.u32 %s70, 1
        %s287 = scalar_lea.sflag [#allocation4], %s286
        %s288 = sand.u32 %s70, 1
        %s289 = smul.addr %s288, 64
        %s290 = scalar_lea.vmem [#allocation3], %s289
        // Predicated region
        $region41: #{tpu_custom_call.1} parent=39 // pred_check
          %p291 = pneg %p83
        $region42: #{tpu_custom_call.1} parent=39 // pred_check_branch
          %293 = sbr.rel (%p291) target = $region44
        $region43: #{tpu_custom_call.1} parent=39 // pred_region
          %294 = dma.done %s287, 1024
        $region44: #{tpu_custom_call.1} parent=39 // pred_fallthru
          _
        %p295 = scmp.lt.s32.totalorder %s28, 1
        %s296 = scalar_select %p295, %s28, 1
        %s297 = smul.addr %s296, 8
        %s298 = scalar_lea.vmem %s0, %s297
        %p299 = pneg %p57
        %p300 = pneg %p54
        %s301 = sand.u32 %s70, 1
        %s302 = scalar_lea.sflag [#allocation4], %s301
        %s303 = sand.u32 %s70, 1
        %s304 = smul.addr %s303, 64
        %s305 = scalar_lea.vmem [#allocation3], %s304
        %p306 = pneg %p83
        %p307 = pneg %p80
        %p308 = scmp.lt.s32.totalorder %s29, 3
        %s309 = scalar_select %p308, %s29, 3
        %s310 = scalar_lea.vmem %s2, %s309
        %p311 = pneg %p109
        %p312 = pneg %p106
        %p313 = scmp.lt.s32.totalorder %s28, 1
        %s314 = scalar_select %p313, %s28, 1
        %s315 = smul.addr %s314, 8
        %s316 = scalar_lea.vmem %s3, %s315
        %p317 = pneg %p135
        %p318 = pneg %p132
        %p319 = scmp.lt.s32.totalorder %s28, 1
        %s320 = scalar_select %p319, %s28, 1
        %s321 = smul.addr %s320, 8
        %s322 = scalar_lea.vmem %s4, %s321
        %p323 = pneg %p161
        %p324 = pneg %p158
        %p325 = pneg %p187
        %p326 = pneg %p184
        %p327 = scmp.lt.s32.totalorder %s28, 1
        %s328 = scalar_select %p327, %s28, 1
        %s329 = smul.addr %s328, 8
        %s330 = scalar_lea.vmem %s5, %s329
        %p331 = pneg %p213
        %p332 = pneg %p210
        %s333 = sand.u32 %s200, 1
        %s334 = scalar_lea.sflag [#allocation5], %s333
        %s335 = sand.u32 %s200, 1
        %s336 = smul.addr %s335, 8
        %s337 = scalar_lea.vmem [#allocation6], %s336
        %p338 = scmp.lt.s32.totalorder %s28, 1
        %s339 = scalar_select %p338, %s28, 1
        %s340 = smul.addr %s339, 8
        %s341 = scalar_lea.vmem %s0, %s340
        %p342 = scmp.lt.s32.totalorder %s29, 3
        %s343 = scalar_select %p342, %s29, 3
        %s344 = scalar_lea.vmem %s2, %s343
        %p345 = scmp.lt.s32.totalorder %s28, 1
        %s346 = scalar_select %p345, %s28, 1
        %s347 = smul.addr %s346, 8
        %s348 = scalar_lea.vmem %s3, %s347
        %p349 = scmp.lt.s32.totalorder %s28, 1
        %s350 = scalar_select %p349, %s28, 1
        %s351 = smul.addr %s350, 8
        %s352 = scalar_lea.vmem %s4, %s351
        %p353 = scmp.lt.s32.totalorder %s28, 1
        %s354 = scalar_select %p353, %s28, 1
        %s355 = smul.addr %s354, 8
        %s356 = scalar_lea.vmem %s5, %s355
        %p357 = scmp.eq.s32.totalorder %s29, 0
        // Predicated region
        $region45: #{tpu_custom_call.1} parent=39 // pred_check
          %p358 = pneg %p357
        $region46: #{tpu_custom_call.1} parent=39 // pred_check_branch
          %360 = sbr.rel (%p358) target = $region48
        $region47: #{tpu_custom_call.1} parent=39 // pred_region
          %vm361 = vcmask 7168
          %362 = vst.msk [vmem:[%s356] sm:$0xff] %vm361, 0.0
          %363 = vst [vmem:[#allocation2] sm:$0xff] 2147483648
        $region48: #{tpu_custom_call.1} parent=39 // pred_fallthru
          _
        %v364 = vld [vmem:[%s341] sm:$0xff]
        %v365 = vld [vmem:[%s290] sm:$0xff]
        %v366 = vld [vmem:[%s290 + $0x8] sm:$0xff]
        %v367 = vld [vmem:[%s290 + $0x10] sm:$0xff]
        %v368 = vld [vmem:[%s290 + $0x18] sm:$0xff]
        %v369 = vld [vmem:[%s290 + $0x20] sm:$0xff]
        %v370 = vld [vmem:[%s290 + $0x28] sm:$0xff]
        %v371 = vld [vmem:[%s290 + $0x30] sm:$0xff]
        %v372 = vld [vmem:[%s290 + $0x38] sm:$0xff]
        %v373 = vld [vmem:[%s352] sm:$0xff]
        %v374 = vld [vmem:[%s348] sm:$0xff]
        %v375 = vld [vmem:[%s344] sm:$0x1]
        %vm376 = vcmask 523264
        %v378 = vsel %vm376, %v364, 0
        %380 = vmatprep.subr.mxu0 0.0
        %381 = vmatpush1.msra.mxu0 %v365
        %382 = vmatprep.subr.mxu0 0.0
        %383 = vmatpush1.msra.mxu0 %v366
        %384 = vmatprep.subr.mxu0 0.0
        %385 = vmatpush1.msra.mxu0 %v367
        %386 = vmatprep.subr.mxu0 0.0
        %387 = vmatpush1.msra.mxu0 %v368
        %388 = vmatprep.subr.mxu0 0.0
        %389 = vmatpush1.msra.mxu0 %v369
        %390 = vmatprep.subr.mxu0 0.0
        %391 = vmatpush1.msra.mxu0 %v370
        %392 = vmatprep.subr.mxu0 0.0
        %393 = vmatpush1.msra.mxu0 %v371
        %394 = vmatprep.subr.mxu0 0.0
        %395 = vmatpush1.msra.mxu0 %v372
        %396 = vmatprep.subr.mxu0 0.0
        %397 = vmatpush1.msra.mxu0 0.0
        %398 = vmatprep.subr.mxu0 0.0
        %399 = vmatpush1.msra.mxu0 0.0
        %400 = vmatprep.subr.mxu0 0.0
        %401 = vmatpush1.msra.mxu0 0.0
        %402 = vmatprep.subr.mxu0 0.0
        %403 = vmatpush1.msra.mxu0 0.0
        %404 = vmatprep.subr.mxu0 0.0
        %405 = vmatpush1.msra.mxu0 0.0
        %406 = vmatprep.subr.mxu0 0.0
        %407 = vmatpush1.msra.mxu0 0.0
        %408 = vmatprep.subr.mxu0 0.0
        %409 = vmatpush1.msra.mxu0 0.0
        %410 = vmatprep.subr.mxu0 0.0
        %411 = vmatpush1.msra.mxu0 0.0
        %412 = vmatprep.subr.mxu0 0.0
        %413 = vmatpush1.msra.mxu0 0.0
        %414 = vmatprep.subr.mxu0 0.0
        %415 = vmatpush1.msra.mxu0 0.0
        %416 = vmatprep.subr.mxu0 0.0
        %417 = vmatpush1.msra.mxu0 0.0
        %418 = vmatprep.subr.mxu0 0.0
        %419 = vmatpush1.msra.mxu0 0.0
        %420 = vmatprep.subr.mxu0 0.0
        %421 = vmatpush1.msra.mxu0 0.0
        %422 = vmatprep.subr.mxu0 0.0
        %423 = vmatpush1.msra.mxu0 0.0
        %424 = vmatprep.subr.mxu0 0.0
        %425 = vmatpush1.msra.mxu0 0.0
        %426 = vmatprep.subr.mxu0 0.0
        %427 = vmatpush1.msra.mxu0 0.0
        %428 = vmatprep.subr.mxu0 0.0
        %429 = vmatpush1.msra.mxu0 0.0
        %430 = vmatprep.subr.mxu0 0.0
        %431 = vmatpush1.msra.mxu0 0.0
        %432 = vmatprep.subr.mxu0 0.0
        %433 = vmatpush1.msra.mxu0 0.0
        %434 = vmatprep.subr.mxu0 0.0
        %435 = vmatpush1.msra.mxu0 0.0
        %436 = vmatprep.subr.mxu0 0.0
        %437 = vmatpush1.msra.mxu0 0.0
        %438 = vmatprep.subr.mxu0 0.0
        %439 = vmatpush1.msra.mxu0 0.0
        %440 = vmatprep.subr.mxu0 0.0
        %441 = vmatpush1.msra.mxu0 0.0
        %442 = vmatprep.subr.mxu0 0.0
        %443 = vmatpush1.msra.mxu0 0.0
        %444 = vmatprep.mubr.f32.mxu0 0.0
        %445 = vmatmul.mubr.f32.gmra.mrb[0].mxu0 %v378
        %v446 = vpop.f32.mrb[0].mxu0
        %v447 = vadd.f32 0.0, %v446
        %v448 = vpop.f32.mrb[0].mxu0
        %449 = vdwg.mxu0
        %451 = vset.pattern.permute.xlu0 0
        %452 = vperm.xlu0 %451, %v374
        %v453 = vpop.permute.xlu0 %452
        %v456 = vlaneseq
        %v457 = vshrl.u32 %v456, 7
        %v458 = vsub.s32 0, %v457
        %v459 = vrot.slane %v375, %v458
        %v461 = vadd.f32 %v453, %v459
        %v462 = vmul.f32 %v447, 2.0
        %v463 = vsub.f32 %v461, %v462
        %v464 = vlaneseq
        %v465 = vand.u32 %v464, 127
        %s466 = smul.u32 %s29, 128
        %v467 = vstv %s466
        %v468 = vadd.s32 %v465, %v467
        %469 = vset.pattern.permute.xlu0 0
        %470 = vperm.xlu0 %469, %v373
        %v471 = vpop.permute.xlu0 %470
        %vm472 = vcmp.eq.s32.totalorder %v468, %v471
        %v473 = vmul.f32 %v463, -10.0
        %v474 = vmul.f32 %v473, 1.442695
        %v475 = vpow.pop %v474
        %v476 = vsel %vm472, 0.0, %v475
        %477 = vmatprep.subr.mxu0 0.0
        %478 = vmatpush1.msra.mxu0 1.0
        %479 = vmatprep.subr.mxu0 0.0
        %480 = vmatpush1.msra.mxu0 1.0
        %481 = vmatprep.subr.mxu0 0.0
        %482 = vmatpush1.msra.mxu0 1.0
        %483 = vmatprep.subr.mxu0 0.0
        %484 = vmatpush1.msra.mxu0 1.0
        %485 = vmatprep.subr.mxu0 0.0
        %486 = vmatpush1.msra.mxu0 1.0
        %487 = vmatprep.subr.mxu0 0.0
        %488 = vmatpush1.msra.mxu0 1.0
        %489 = vmatprep.subr.mxu0 0.0
        %490 = vmatpush1.msra.mxu0 1.0
        %491 = vmatprep.subr.mxu0 0.0
        %492 = vmatpush1.msra.mxu0 1.0
        %493 = vmatprep.subr.mxu0 0.0
        %494 = vmatpush1.msra.mxu0 1.0
        %495 = vmatprep.subr.mxu0 0.0
        %496 = vmatpush1.msra.mxu0 1.0
        %497 = vmatprep.subr.mxu0 0.0
        %498 = vmatpush1.msra.mxu0 1.0
        %499 = vmatprep.subr.mxu0 0.0
        %500 = vmatpush1.msra.mxu0 1.0
        %501 = vmatprep.subr.mxu0 0.0
        %502 = vmatpush1.msra.mxu0 1.0
        %503 = vmatprep.subr.mxu0 0.0
        %504 = vmatpush1.msra.mxu0 1.0
        %505 = vmatprep.subr.mxu0 0.0
        %506 = vmatpush1.msra.mxu0 1.0
        %507 = vmatprep.subr.mxu0 0.0
        %508 = vmatpush1.msra.mxu0 1.0
        %509 = vmatprep.subr.mxu0 0.0
        %510 = vmatpush1.msra.mxu0 0.0
        %511 = vmatprep.subr.mxu0 0.0
        %512 = vmatpush1.msra.mxu0 0.0
        %513 = vmatprep.subr.mxu0 0.0
        %514 = vmatpush1.msra.mxu0 0.0
        %515 = vmatprep.subr.mxu0 0.0
        %516 = vmatpush1.msra.mxu0 0.0
        %517 = vmatprep.subr.mxu0 0.0
        %518 = vmatpush1.msra.mxu0 0.0
        %519 = vmatprep.subr.mxu0 0.0
        %520 = vmatpush1.msra.mxu0 0.0
        %521 = vmatprep.subr.mxu0 0.0
        %522 = vmatpush1.msra.mxu0 0.0
        %523 = vmatprep.subr.mxu0 0.0
        %524 = vmatpush1.msra.mxu0 0.0
        %525 = vmatprep.subr.mxu0 0.0
        %526 = vmatpush1.msra.mxu0 0.0
        %527 = vmatprep.subr.mxu0 0.0
        %528 = vmatpush1.msra.mxu0 0.0
        %529 = vmatprep.subr.mxu0 0.0
        %530 = vmatpush1.msra.mxu0 0.0
        %531 = vmatprep.subr.mxu0 0.0
        %532 = vmatpush1.msra.mxu0 0.0
        %533 = vmatprep.subr.mxu0 0.0
        %534 = vmatpush1.msra.mxu0 0.0
        %535 = vmatprep.subr.mxu0 0.0
        %536 = vmatpush1.msra.mxu0 0.0
        %537 = vmatprep.subr.mxu0 0.0
        %538 = vmatpush1.msra.mxu0 0.0
        %539 = vmatprep.subr.mxu0 0.0
        %540 = vmatpush1.msra.mxu0 0.0
        %541 = vmatprep.mubr.f32.mxu0 0.0
        %542 = vmatmul.mubr.f32.gmra.mrb[0].mxu0 %v476
        %v543 = vpop.f32.mrb[0].mxu0
        %v544 = vadd.f32 0.0, %v543
        %v545 = vpop.f32.mrb[0].mxu0
        %546 = vdwg.mxu0
        %v547 = vld [vmem:[%s356] sm:$0xff]
        %v548 = vadd.f32 %v547, %v544
        %vm549 = vcmask 7168
        %550 = vst.msk [vmem:[%s356] sm:$0xff] %vm549, %v548
        %v552 = vand.u32 %v476, 4294966784
        %v553 = vsub.s32 511, %v468
        %v554 = vor.u32 %v552, %v553
        %v555 = vsel %vm472, 2147483648, %v554
        %v556 = vld [vmem:[#allocation2] sm:$0xff]
        %vm557 = vcmp.gt.s32.totalorder %v556, %v555
        %v558 = vsel %vm557, %v556, %v555
        %v559 = vand.u32 %v558, 65535
        %v560 = vshra.s32 %v558, 16
        %v561 = vcvt.s32.f32 %v559
        %v562 = vcvt.s32.f32 %v560
        %563 = vmax.xlane.f32.xlu0 %v562
        %v564 = vpop.xlane.xlu0 %563
        %vm565 = vcmp.eq.f32.partialorder %v562, %v564
        %v566 = vsel %vm565, %v561, -inf
        %567 = vmax.xlane.f32.xlu0 %v566
        %v568 = vpop.xlane.xlu0 %567
        %v569 = vcvt.f32.s32 %v568
        %v570 = vcvt.f32.s32 %v564
        %v571 = vshll.u32 %v570, 16
        %v572 = vadd.s32 %v571, %v569
        %vm573 = vcmp.eq.s32.totalorder %v465, 0
        %v574 = vsel %vm573, %v572, 2147483648
        %vm575 = vcmp.eq.s32.totalorder %v555, %v572
        %v576 = vsel %vm575, 2147483648, %v555
        %vm577 = vcmp.eq.s32.totalorder %v556, %v572
        %v578 = vsel %vm577, 2147483648, %v556
        %vm579 = vcmp.gt.s32.totalorder %v578, %v576
        %v580 = vsel %vm579, %v578, %v576
        %v581 = vand.u32 %v580, 65535
        %v582 = vshra.s32 %v580, 16
        %v583 = vcvt.s32.f32 %v581
        %v584 = vcvt.s32.f32 %v582
        %585 = vmax.xlane.f32.xlu0 %v584
        %v586 = vpop.xlane.xlu0 %585
        %vm587 = vcmp.eq.f32.partialorder %v584, %v586
        %v588 = vsel %vm587, %v583, -inf
        %589 = vmax.xlane.f32.xlu0 %v588
        %v590 = vpop.xlane.xlu0 %589
        %v591 = vcvt.f32.s32 %v590
        %v592 = vcvt.f32.s32 %v586
        %v593 = vshll.u32 %v592, 16
        %v594 = vadd.s32 %v593, %v591
        %vm595 = vcmp.eq.s32.totalorder %v465, 1
        %v596 = vsel %vm595, %v594, %v574
        %vm597 = vcmp.eq.s32.totalorder %v576, %v594
        %v598 = vsel %vm597, 2147483648, %v576
        %vm599 = vcmp.eq.s32.totalorder %v578, %v594
        %v600 = vsel %vm599, 2147483648, %v578
        %vm601 = vcmp.gt.s32.totalorder %v600, %v598
        %v602 = vsel %vm601, %v600, %v598
        %v603 = vand.u32 %v602, 65535
        %v604 = vshra.s32 %v602, 16
        %v605 = vcvt.s32.f32 %v603
        %v606 = vcvt.s32.f32 %v604
        %607 = vmax.xlane.f32.xlu0 %v606
        %v608 = vpop.xlane.xlu0 %607
        %vm609 = vcmp.eq.f32.partialorder %v606, %v608
        %v610 = vsel %vm609, %v605, -inf
        %611 = vmax.xlane.f32.xlu0 %v610
        %v612 = vpop.xlane.xlu0 %611
        %v613 = vcvt.f32.s32 %v612
        %v614 = vcvt.f32.s32 %v608
        %v615 = vshll.u32 %v614, 16
        %v616 = vadd.s32 %v615, %v613
        %vm617 = vcmp.eq.s32.totalorder %v465, 2
        %v618 = vsel %vm617, %v616, %v596
        %vm619 = vcmp.eq.s32.totalorder %v598, %v616
        %v620 = vsel %vm619, 2147483648, %v598
        %vm621 = vcmp.eq.s32.totalorder %v600, %v616
        %v622 = vsel %vm621, 2147483648, %v600
        %vm623 = vcmp.gt.s32.totalorder %v622, %v620
        %v624 = vsel %vm623, %v622, %v620
        %v625 = vand.u32 %v624, 65535
        %v626 = vshra.s32 %v624, 16
        %v627 = vcvt.s32.f32 %v625
        %v628 = vcvt.s32.f32 %v626
        %629 = vmax.xlane.f32.xlu0 %v628
        %v630 = vpop.xlane.xlu0 %629
        %vm631 = vcmp.eq.f32.partialorder %v628, %v630
        %v632 = vsel %vm631, %v627, -inf
        %633 = vmax.xlane.f32.xlu0 %v632
        %v634 = vpop.xlane.xlu0 %633
        %v635 = vcvt.f32.s32 %v634
        %v636 = vcvt.f32.s32 %v630
        %v637 = vshll.u32 %v636, 16
        %v638 = vadd.s32 %v637, %v635
        %vm639 = vcmp.eq.s32.totalorder %v465, 3
        %v640 = vsel %vm639, %v638, %v618
        %vm641 = vcmp.eq.s32.totalorder %v620, %v638
        %v642 = vsel %vm641, 2147483648, %v620
        %vm643 = vcmp.eq.s32.totalorder %v622, %v638
        %v644 = vsel %vm643, 2147483648, %v622
        %vm645 = vcmp.gt.s32.totalorder %v644, %v642
        %v646 = vsel %vm645, %v644, %v642
        %v647 = vand.u32 %v646, 65535
        %v648 = vshra.s32 %v646, 16
        %v649 = vcvt.s32.f32 %v647
        %v650 = vcvt.s32.f32 %v648
        %651 = vmax.xlane.f32.xlu0 %v650
        %v652 = vpop.xlane.xlu0 %651
        %vm653 = vcmp.eq.f32.partialorder %v650, %v652
        %v654 = vsel %vm653, %v649, -inf
        %655 = vmax.xlane.f32.xlu0 %v654
        %v656 = vpop.xlane.xlu0 %655
        %v657 = vcvt.f32.s32 %v656
        %v658 = vcvt.f32.s32 %v652
        %v659 = vshll.u32 %v658, 16
        %v660 = vadd.s32 %v659, %v657
        %vm661 = vcmp.eq.s32.totalorder %v465, 4
        %v662 = vsel %vm661, %v660, %v640
        %vm663 = vcmp.eq.s32.totalorder %v642, %v660
        %v664 = vsel %vm663, 2147483648, %v642
        %vm665 = vcmp.eq.s32.totalorder %v644, %v660
        %v666 = vsel %vm665, 2147483648, %v644
        %vm667 = vcmp.gt.s32.totalorder %v666, %v664
        %v668 = vsel %vm667, %v666, %v664
        %v669 = vand.u32 %v668, 65535
        %v670 = vshra.s32 %v668, 16
        %v671 = vcvt.s32.f32 %v669
        %v672 = vcvt.s32.f32 %v670
        %673 = vmax.xlane.f32.xlu0 %v672
        %v674 = vpop.xlane.xlu0 %673
        %vm675 = vcmp.eq.f32.partialorder %v672, %v674
        %v676 = vsel %vm675, %v671, -inf
        %677 = vmax.xlane.f32.xlu0 %v676
        %v678 = vpop.xlane.xlu0 %677
        %v679 = vcvt.f32.s32 %v678
        %v680 = vcvt.f32.s32 %v674
        %v681 = vshll.u32 %v680, 16
        %v682 = vadd.s32 %v681, %v679
        %vm683 = vcmp.eq.s32.totalorder %v465, 5
        %v684 = vsel %vm683, %v682, %v662
        %vm685 = vcmp.eq.s32.totalorder %v664, %v682
        %v686 = vsel %vm685, 2147483648, %v664
        %vm687 = vcmp.eq.s32.totalorder %v666, %v682
        %v688 = vsel %vm687, 2147483648, %v666
        %vm689 = vcmp.gt.s32.totalorder %v688, %v686
        %v690 = vsel %vm689, %v688, %v686
        %v691 = vand.u32 %v690, 65535
        %v692 = vshra.s32 %v690, 16
        %v693 = vcvt.s32.f32 %v691
        %v694 = vcvt.s32.f32 %v692
        %695 = vmax.xlane.f32.xlu0 %v694
        %v696 = vpop.xlane.xlu0 %695
        %vm697 = vcmp.eq.f32.partialorder %v694, %v696
        %v698 = vsel %vm697, %v693, -inf
        %699 = vmax.xlane.f32.xlu0 %v698
        %v700 = vpop.xlane.xlu0 %699
        %v701 = vcvt.f32.s32 %v700
        %v702 = vcvt.f32.s32 %v696
        %v703 = vshll.u32 %v702, 16
        %v704 = vadd.s32 %v703, %v701
        %vm705 = vcmp.eq.s32.totalorder %v465, 6
        %v706 = vsel %vm705, %v704, %v684
        %vm707 = vcmp.eq.s32.totalorder %v686, %v704
        %v708 = vsel %vm707, 2147483648, %v686
        %vm709 = vcmp.eq.s32.totalorder %v688, %v704
        %v710 = vsel %vm709, 2147483648, %v688
        %vm711 = vcmp.gt.s32.totalorder %v710, %v708
        %v712 = vsel %vm711, %v710, %v708
        %v713 = vand.u32 %v712, 65535
        %v714 = vshra.s32 %v712, 16
        %v715 = vcvt.s32.f32 %v713
        %v716 = vcvt.s32.f32 %v714
        %717 = vmax.xlane.f32.xlu0 %v716
        %v718 = vpop.xlane.xlu0 %717
        %vm719 = vcmp.eq.f32.partialorder %v716, %v718
        %v720 = vsel %vm719, %v715, -inf
        %721 = vmax.xlane.f32.xlu0 %v720
        %v722 = vpop.xlane.xlu0 %721
        %v723 = vcvt.f32.s32 %v722
        %v724 = vcvt.f32.s32 %v718
        %v725 = vshll.u32 %v724, 16
        %v726 = vadd.s32 %v725, %v723
        %vm727 = vcmp.eq.s32.totalorder %v465, 7
        %v728 = vsel %vm727, %v726, %v706
        %vm729 = vcmp.eq.s32.totalorder %v708, %v726
        %v730 = vsel %vm729, 2147483648, %v708
        %vm731 = vcmp.eq.s32.totalorder %v710, %v726
        %v732 = vsel %vm731, 2147483648, %v710
        %vm733 = vcmp.gt.s32.totalorder %v732, %v730
        %v734 = vsel %vm733, %v732, %v730
        %v735 = vand.u32 %v734, 65535
        %v736 = vshra.s32 %v734, 16
        %v737 = vcvt.s32.f32 %v735
        %v738 = vcvt.s32.f32 %v736
        %739 = vmax.xlane.f32.xlu0 %v738
        %v740 = vpop.xlane.xlu0 %739
        %vm741 = vcmp.eq.f32.partialorder %v738, %v740
        %v742 = vsel %vm741, %v737, -inf
        %743 = vmax.xlane.f32.xlu0 %v742
        %v744 = vpop.xlane.xlu0 %743
        %v745 = vcvt.f32.s32 %v744
        %v746 = vcvt.f32.s32 %v740
        %v747 = vshll.u32 %v746, 16
        %v748 = vadd.s32 %v747, %v745
        %vm749 = vcmp.eq.s32.totalorder %v465, 8
        %v750 = vsel %vm749, %v748, %v728
        %vm751 = vcmp.eq.s32.totalorder %v730, %v748
        %v752 = vsel %vm751, 2147483648, %v730
        %vm753 = vcmp.eq.s32.totalorder %v732, %v748
        %v754 = vsel %vm753, 2147483648, %v732
        %vm755 = vcmp.gt.s32.totalorder %v754, %v752
        %v756 = vsel %vm755, %v754, %v752
        %v757 = vand.u32 %v756, 65535
        %v758 = vshra.s32 %v756, 16
        %v759 = vcvt.s32.f32 %v757
        %v760 = vcvt.s32.f32 %v758
        %761 = vmax.xlane.f32.xlu0 %v760
        %v762 = vpop.xlane.xlu0 %761
        %vm763 = vcmp.eq.f32.partialorder %v760, %v762
        %v764 = vsel %vm763, %v759, -inf
        %765 = vmax.xlane.f32.xlu0 %v764
        %v766 = vpop.xlane.xlu0 %765
        %v767 = vcvt.f32.s32 %v766
        %v768 = vcvt.f32.s32 %v762
        %v769 = vshll.u32 %v768, 16
        %v770 = vadd.s32 %v769, %v767
        %vm771 = vcmp.eq.s32.totalorder %v465, 9
        %v772 = vsel %vm771, %v770, %v750
        %p773 = scmp.eq.s32.totalorder %s29, 3
        %p774 = scmp.ne.s32.totalorder %s29, 3
        // Predicated region
        $region49: #{tpu_custom_call.1} parent=39 // pred_check
          %p775 = pneg %p774
        $region50: #{tpu_custom_call.1} parent=39 // pred_check_branch
          %777 = sbr.rel (%p775) target = $region52
        $region51: #{tpu_custom_call.1} parent=39 // pred_region
          %778 = vst [vmem:[#allocation2] sm:$0xff] %v772
        $region52: #{tpu_custom_call.1} parent=39 // pred_fallthru
          _
        // Predicated region
        $region53: #{tpu_custom_call.1} parent=39 // pred_check
          %p779 = pneg %p773
        $region54: #{tpu_custom_call.1} parent=39 // pred_check_branch
          %781 = sbr.rel (%p779) target = $region56
        $region55: #{tpu_custom_call.1} parent=39 // pred_region
          %vm782 = vcmp.ge.s32.totalorder %v772, 0
          %v783 = vand.u32 %v772, 511
          %v784 = vsub.s32 511, %v783
          %v785 = vand.u32 %v772, 4294966784
          %v787 = vsel %vm782, %v785, 0.0
          %788 = vadd.xlane.f32.xlu0 %v787
          %v789 = vpop.xlane.xlu0 %788
          %v790 = vlog2.pop %v789
          %v791 = vmul.f32 %v790, 0.6931472
          %v792 = vld [vmem:[%s356] sm:$0xff]
          %v793 = vlog2.pop %v792
          %v794 = vmul.f32 %v793, 0.6931472
          %v795 = vsub.f32 0.0, %v791
          %v796 = vadd.f32 %v795, %v794
          %797 = vst.msk [vmem:[%s356] sm:$0xff] %vm549, %v796
          %vm798 = vcmp.gt.s32.totalorder %v784, %v471
          %v799 = vsel %vm798, 1, 0
          %v800 = vsub.s32 %v784, %v799
          %v801 = vsel %vm782, %v800, 0
          %vm802 = vcmask 80896
          %803 = vst.msk [vmem:[%s337] sm:$0xff] %vm802, %v801
        $region56: #{tpu_custom_call.1} parent=39 // pred_fallthru
          _
        %p804 = scmp.lt.s32.totalorder %s28, 1
        %s805 = scalar_select %p804, %s28, 1
        %s806 = smul.addr %s805, 8
        %s807 = scalar_lea.vmem %s5, %s806
        %s808 = sand.u32 %s200, 1
        %s809 = scalar_lea.sflag [#allocation5], %s808
        %s810 = sand.u32 %s200, 1
        %s811 = smul.addr %s810, 8
        %s812 = scalar_lea.vmem [#allocation6], %s811
        // Predicated region
        $region57: #{tpu_custom_call.1} parent=39 // pred_check
          %p813 = pneg %p184
        $region58: #{tpu_custom_call.1} parent=39 // pred_check_branch
          %815 = sbr.rel (%p813) target = $region60
        $region59: #{tpu_custom_call.1} parent=39 // pred_region
          _
        $region60: #{tpu_custom_call.1} parent=39 // pred_fallthru
          _
        // Predicated region
        $region61: #{tpu_custom_call.1} parent=39 // pred_check
          %p816 = pneg %p210
        $region62: #{tpu_custom_call.1} parent=39 // pred_check_branch
          %818 = sbr.rel (%p816) target = $region64
        $region63: #{tpu_custom_call.1} parent=39 // pred_region
          %s820 = ssub.s32 128, 128
          %821 = vsyncadd %s809, %s820
          %s822 = smul.addr %s28, 128
          %s823 = scalar_lea.hbm %s6, %s822
          %s825 = sshll.u32 %s812, 4
          %s826 = int_to_ptr.vmem [resolvable:$true] %s825
          %828 = dma.vmem_to_hbm [thread:$0]  %s826, 128, %s823, %s809
        $region64: #{tpu_custom_call.1} parent=39 // pred_fallthru
          _
      $region40: #{tpu_custom_call.1} parent=5 // pred_fallthru
        _
      %p829 = scmp.le.s32.totalorder 2, %s19
      // Predicated region
      $region65: #{tpu_custom_call.1} parent=5 // pred_check
        %p830 = pneg %p829
      $region66: #{tpu_custom_call.1} parent=5 // pred_check_branch
        %832 = sbr.rel (%p830) target = $region68
      $region67: #{tpu_custom_call.1} parent=5 // pred_region
        %s833 = ssub.s32 %s19, 2
        // Predicated region
        $region69: #{tpu_custom_call.1} parent=67 // pred_check
          %p834 = pneg %p190
        $region70: #{tpu_custom_call.1} parent=67 // pred_check_branch
          %836 = sbr.rel (%p834) target = $region72
        $region71: #{tpu_custom_call.1} parent=67 // pred_region
          %p837 = scmp.lt.s32.totalorder %s30, 1
          %s838 = scalar_select %p837, %s30, 1
          %s839 = smul.addr %s838, 8
          %s840 = scalar_lea.vmem %s5, %s839
        $region72: #{tpu_custom_call.1} parent=67 // pred_fallthru
          _
        // Predicated region
        $region73: #{tpu_custom_call.1} parent=67 // pred_check
          %p841 = pneg %p216
        $region74: #{tpu_custom_call.1} parent=67 // pred_check_branch
          %843 = sbr.rel (%p841) target = $region76
        $region75: #{tpu_custom_call.1} parent=67 // pred_region
          %s844 = sand.u32 %s201, 1
          %s845 = scalar_lea.sflag [#allocation5], %s844
          %s846 = sand.u32 %s201, 1
          %s847 = smul.addr %s846, 8
          %s848 = scalar_lea.vmem [#allocation6], %s847
          %849 = dma.done %s845, 128
        $region76: #{tpu_custom_call.1} parent=67 // pred_fallthru
          _
      $region68: #{tpu_custom_call.1} parent=5 // pred_fallthru
        _
    $region6: #{tpu_custom_call.1} parent=1 // loop_footer
      %s23 = sadd.s32 1, %s19
    $region7: #{tpu_custom_call.1} parent=1 // loop_footer_branch
      %18 = sbr.rel target = $region3
    $region8: #{tpu_custom_call.1} parent=1 // loop_exit
      _
    %850 = vsyncpa [#allocation4], 1
    %s851 = scalar_lea.sflag [#allocation4], 1
    %852 = vsyncpa %s851, 1
    %853 = vsyncpa [#allocation5], 1
    %s854 = scalar_lea.sflag [#allocation5], 1
    %855 = vsyncpa %s854, 1

</llo_original>
